<compile_context>
chip_gen: v7x
topology: tpu7x:2x2x1
jax: 0.10.0
libtpu: 0.0.40
codegen_flags: <defaults>
</compile_context>

<pallas_src>
import functools

import jax
import jax.numpy as jnp
from jax.experimental import pallas as pl
from jax.experimental.pallas import tpu as pltpu


def _bilinear_matrix(out_size: int, in_size: int) -> jnp.ndarray:
    """1-D bilinear resize matrix (out_size, in_size), half-pixel centers."""
    dst = jnp.arange(out_size, dtype=jnp.float32)
    src = (dst + 0.5) * (in_size / out_size) - 0.5
    src = jnp.clip(src, 0.0, float(in_size - 1))
    i0 = jnp.floor(src).astype(jnp.int32)
    i1 = jnp.minimum(i0 + 1, in_size - 1)
    frac = src - i0.astype(jnp.float32)
    rows = jnp.arange(out_size)
    w = jnp.zeros((out_size, in_size), dtype=jnp.float32)
    w = w.at[rows, i0].add(1.0 - frac)
    w = w.at[rows, i1].add(frac)
    return w


def _resize_kernel(img_ref, wh_ref, wwT_ref, out_ref, *, C: int, Hi: int):
    # img_ref : (C*Hi, Wi)        -- leading dims folded into the row (M) dim
    # wh_ref  : (Ho_pad, Hi)      -- vertical weights, sublane-padded with 0 rows
    # wwT_ref : (Wi, Wo_pad)      -- horizontal weights, transposed + lane-padded
    # out_ref : (C, Ho_pad, Wo_pad)
    x = img_ref[...].astype(jnp.float32)
    # Stage 1: one big matmul for all channels at once (M = C*Hi, N = Wo_pad).
    t = jnp.dot(x, wwT_ref[...], preferred_element_type=jnp.float32)  # (C*Hi, Wo_pad)
    wh = wh_ref[...]                                                  # (Ho_pad, Hi)

    integral = jnp.issubdtype(out_ref.dtype, jnp.integer)
    # Stage 2: statically unrolled over the (small, static) channel count;
    # (Ho_pad, Wo_pad) output tiles -> every store is an unmasked full vst.
    for c in range(C):
        y = jnp.dot(wh, t[c * Hi:(c + 1) * Hi, :],
                    preferred_element_type=jnp.float32)               # (Ho_pad, Wo_pad)
        if integral:
            info = jnp.iinfo(out_ref.dtype)
            y = jnp.clip(jnp.rint(y), info.min, info.max)
        out_ref[c] = y.astype(out_ref.dtype)


def bilinear_resize_pallas(img: jnp.ndarray, h_out: int, w_out: int) -> jnp.ndarray:
    """Bilinear-resize an (..., H, W) array to (..., h_out, w_out) with Pallas."""
    *lead, Hi, Wi = img.shape
    Ctot = 1
    for d in lead:
        Ctot *= int(d)
    Ho, Wo = int(h_out), int(w_out)
    Ho_pad = ((Ho + 7) // 8) * 8                  # sublane-dense output height
    Wo_pad = ((Wo + 127) // 128) * 128            # lane-dense output width

    wh = jnp.zeros((Ho_pad, Hi), dtype=jnp.float32)
    wh = wh.at[:Ho, :].set(_bilinear_matrix(Ho, Hi))                     # (Ho_pad, Hi)
    wwT = jnp.zeros((Wi, Wo_pad), dtype=jnp.float32)
    wwT = wwT.at[:, :Wo].set(_bilinear_matrix(Wo, Wi).T)                 # (Wi, Wo_pad)

    img2d = img.reshape(Ctot * Hi, Wi)            # free: (..., H, W) is contiguous

    itemsize = jnp.dtype(img.dtype).itemsize
    flops = 2 * Ctot * Hi * Wi * Wo_pad + 2 * Ctot * Ho_pad * Hi * Wo_pad
    bytes_accessed = (img2d.size * itemsize + wh.size * 4 + wwT.size * 4
                      + Ctot * Ho_pad * Wo_pad * itemsize)

    # Double-buffered inputs/outputs + f32 intermediates, with headroom.
    est_vmem = (2 * (img2d.size * itemsize + wh.size * 4 + wwT.size * 4
                     + Ctot * Ho_pad * Wo_pad * itemsize)
                + 4 * (Ctot * Hi * Wo_pad + Ho_pad * Wo_pad) + (2 << 20))
    vmem_limit = int(min(max(est_vmem, 32 << 20), 64 << 20))

    kernel = functools.partial(_resize_kernel, C=Ctot, Hi=Hi)

    out_pad = pl.pallas_call(
        kernel,
        out_shape=jax.ShapeDtypeStruct((Ctot, Ho_pad, Wo_pad), img.dtype),
        grid=(1,),
        in_specs=[
            pl.BlockSpec((Ctot * Hi, Wi), lambda i: (0, 0)),
            pl.BlockSpec((Ho_pad, Hi), lambda i: (0, 0)),
            pl.BlockSpec((Wi, Wo_pad), lambda i: (0, 0)),
        ],
        out_specs=pl.BlockSpec((Ctot, Ho_pad, Wo_pad), lambda i: (0, 0, 0)),
        compiler_params=pltpu.CompilerParams(
            dimension_semantics=("arbitrary",),
            vmem_limit_bytes=vmem_limit),
        cost_estimate=pl.CostEstimate(
            flops=flops, transcendentals=0, bytes_accessed=bytes_accessed),
    )(img2d, wh, wwT)

    out = out_pad[:, :Ho, :Wo]
    return out.reshape(*lead, Ho, Wo)


def custom_random_resize(img: jnp.ndarray, key, scale_range=(0.5, 2.0)):
    """Forward pass of CustomRandomResize for an (..., H, W) image tensor."""
    min_s, max_s = min(scale_range), max(scale_range)
    # Deterministic replacement of python `random.uniform` (host-side glue).
    scale = float(jax.random.uniform(key, (), minval=min_s, maxval=max_s))
    H, W = img.shape[-2], img.shape[-1]
    new_h, new_w = int(H * scale), int(W * scale)
    return bilinear_resize_pallas(img, new_h, new_w), scale


if __name__ == "__main__":
    key = jax.random.PRNGKey(0)
    k_scale, k_img = jax.random.split(key)

    B, C, H, W = 2, 4, 16, 16
    img = jax.random.normal(k_img, (B, C, H, W), dtype=jnp.float32)

    out, scale = custom_random_resize(img, k_scale, scale_range=(0.5, 2.0))
    out = jax.block_until_ready(out)

    # Pure-JAX reference using the same separable bilinear weights.
    Ho, Wo = out.shape[-2], out.shape[-1]
    wh_ref = _bilinear_matrix(Ho, H)
    ww_ref = _bilinear_matrix(Wo, W)
    ref = jnp.einsum("oh,bchw,xw->bcox", wh_ref, img, ww_ref)

    assert out.shape == (B, C, Ho, Wo), (out.shape, (B, C, Ho, Wo))
    assert jnp.allclose(out, ref, atol=1e-5, rtol=1e-5), "mismatch vs reference"

    print("KERNEL_OK")
</pallas_src>

<mosaic_0001>
module attributes {stable_mosaic.version = 11 : i64} {
  func.func @_resize_kernel(%arg0: i32, %arg1: memref<128x16xf32, #tpu.memory_space<vmem>>, %arg2: memref<32x16xf32, #tpu.memory_space<vmem>>, %arg3: memref<16x128xf32, #tpu.memory_space<vmem>>, %arg4: memref<8x32x128xf32, #tpu.memory_space<vmem>>) attributes {dimension_semantics = [#tpu.dimension_semantics<arbitrary>], iteration_bounds = array<i64: 1>, scalar_prefetch = 0 : i64, scratch_operands = 0 : i64, tpu.core_type = #tpu.core_type<tc>, window_params = [{pipeline_mode = #tpu.pipeline_mode<synchronous>, transform_indices = @transform_0, window_bounds = array<i64: 128, 16>}, {pipeline_mode = #tpu.pipeline_mode<synchronous>, transform_indices = @transform_1, window_bounds = array<i64: 32, 16>}, {pipeline_mode = #tpu.pipeline_mode<synchronous>, transform_indices = @transform_2, window_bounds = array<i64: 16, 128>}, {pipeline_mode = #tpu.pipeline_mode<synchronous>, transform_indices = @transform_3, window_bounds = array<i64: 8, 32, 128>}]} {
    %c0 = arith.constant 0 : index
    %c0_0 = arith.constant 0 : index
    %0 = vector.load %arg1[%c0, %c0_0] : memref<128x16xf32, #tpu.memory_space<vmem>>, vector<128x16xf32>
    %c0_1 = arith.constant 0 : index
    %c0_2 = arith.constant 0 : index
    %1 = vector.load %arg3[%c0_1, %c0_2] : memref<16x128xf32, #tpu.memory_space<vmem>>, vector<16x128xf32>
    %cst = arith.constant dense<0.000000e+00> : vector<128x128xf32>
    %2 = tpu.matmul %0, %1, %cst {dimension_numbers = #tpu.dot_dimension_numbers<[1], [0], [0], [1], [0, 0, 1, 1], [], []>} : vector<128x16xf32>, vector<16x128xf32>, vector<128x128xf32> -> vector<128x128xf32>
    %c0_3 = arith.constant 0 : index
    %c0_4 = arith.constant 0 : index
    %3 = vector.load %arg2[%c0_3, %c0_4] : memref<32x16xf32, #tpu.memory_space<vmem>>, vector<32x16xf32>
    %4 = vector.extract_strided_slice %2 {offsets = [0, 0], sizes = [16, 128], strides = [1, 1]} : vector<128x128xf32> to vector<16x128xf32>
    %cst_5 = arith.constant dense<0.000000e+00> : vector<32x128xf32>
    %5 = tpu.matmul %3, %4, %cst_5 {dimension_numbers = #tpu.dot_dimension_numbers<[1], [0], [0], [1], [0, 0, 1, 1], [], []>} : vector<32x16xf32>, vector<16x128xf32>, vector<32x128xf32> -> vector<32x128xf32>
    %c0_6 = arith.constant 0 : index
    %c0_7 = arith.constant 0 : index
    %c0_8 = arith.constant 0 : index
    %6 = vector.load %arg4[%c0_6, %c0_7, %c0_8] : memref<8x32x128xf32, #tpu.memory_space<vmem>>, vector<1x32x128xf32>
    %7 = vector.shape_cast %6 : vector<1x32x128xf32> to vector<32x128xf32>
    %8 = vector.shape_cast %5 : vector<32x128xf32> to vector<1x32x128xf32>
    tpu.vector_store %arg4[%c0_6, %c0_7, %c0_8], %8 {strides = array<i32>} : memref<8x32x128xf32, #tpu.memory_space<vmem>>, vector<1x32x128xf32>,
    %9 = vector.extract_strided_slice %2 {offsets = [16, 0], sizes = [16, 128], strides = [1, 1]} : vector<128x128xf32> to vector<16x128xf32>
    %cst_9 = arith.constant dense<0.000000e+00> : vector<32x128xf32>
    %10 = tpu.matmul %3, %9, %cst_9 {dimension_numbers = #tpu.dot_dimension_numbers<[1], [0], [0], [1], [0, 0, 1, 1], [], []>} : vector<32x16xf32>, vector<16x128xf32>, vector<32x128xf32> -> vector<32x128xf32>
    %c1 = arith.constant 1 : index
    %c0_10 = arith.constant 0 : index
    %c0_11 = arith.constant 0 : index
    %11 = vector.load %arg4[%c1, %c0_10, %c0_11] : memref<8x32x128xf32, #tpu.memory_space<vmem>>, vector<1x32x128xf32>
    %12 = vector.shape_cast %11 : vector<1x32x128xf32> to vector<32x128xf32>
    %13 = vector.shape_cast %10 : vector<32x128xf32> to vector<1x32x128xf32>
    tpu.vector_store %arg4[%c1, %c0_10, %c0_11], %13 {strides = array<i32>} : memref<8x32x128xf32, #tpu.memory_space<vmem>>, vector<1x32x128xf32>,
    %14 = vector.extract_strided_slice %2 {offsets = [32, 0], sizes = [16, 128], strides = [1, 1]} : vector<128x128xf32> to vector<16x128xf32>
    %cst_12 = arith.constant dense<0.000000e+00> : vector<32x128xf32>
    %15 = tpu.matmul %3, %14, %cst_12 {dimension_numbers = #tpu.dot_dimension_numbers<[1], [0], [0], [1], [0, 0, 1, 1], [], []>} : vector<32x16xf32>, vector<16x128xf32>, vector<32x128xf32> -> vector<32x128xf32>
    %c2 = arith.constant 2 : index
    %c0_13 = arith.constant 0 : index
    %c0_14 = arith.constant 0 : index
    %16 = vector.load %arg4[%c2, %c0_13, %c0_14] : memref<8x32x128xf32, #tpu.memory_space<vmem>>, vector<1x32x128xf32>
    %17 = vector.shape_cast %16 : vector<1x32x128xf32> to vector<32x128xf32>
    %18 = vector.shape_cast %15 : vector<32x128xf32> to vector<1x32x128xf32>
    tpu.vector_store %arg4[%c2, %c0_13, %c0_14], %18 {strides = array<i32>} : memref<8x32x128xf32, #tpu.memory_space<vmem>>, vector<1x32x128xf32>,
    %19 = vector.extract_strided_slice %2 {offsets = [48, 0], sizes = [16, 128], strides = [1, 1]} : vector<128x128xf32> to vector<16x128xf32>
    %cst_15 = arith.constant dense<0.000000e+00> : vector<32x128xf32>
    %20 = tpu.matmul %3, %19, %cst_15 {dimension_numbers = #tpu.dot_dimension_numbers<[1], [0], [0], [1], [0, 0, 1, 1], [], []>} : vector<32x16xf32>, vector<16x128xf32>, vector<32x128xf32> -> vector<32x128xf32>
    %c3 = arith.constant 3 : index
    %c0_16 = arith.constant 0 : index
    %c0_17 = arith.constant 0 : index
    %21 = vector.load %arg4[%c3, %c0_16, %c0_17] : memref<8x32x128xf32, #tpu.memory_space<vmem>>, vector<1x32x128xf32>
    %22 = vector.shape_cast %21 : vector<1x32x128xf32> to vector<32x128xf32>
    %23 = vector.shape_cast %20 : vector<32x128xf32> to vector<1x32x128xf32>
    tpu.vector_store %arg4[%c3, %c0_16, %c0_17], %23 {strides = array<i32>} : memref<8x32x128xf32, #tpu.memory_space<vmem>>, vector<1x32x128xf32>,
    %24 = vector.extract_strided_slice %2 {offsets = [64, 0], sizes = [16, 128], strides = [1, 1]} : vector<128x128xf32> to vector<16x128xf32>
    %cst_18 = arith.constant dense<0.000000e+00> : vector<32x128xf32>
    %25 = tpu.matmul %3, %24, %cst_18 {dimension_numbers = #tpu.dot_dimension_numbers<[1], [0], [0], [1], [0, 0, 1, 1], [], []>} : vector<32x16xf32>, vector<16x128xf32>, vector<32x128xf32> -> vector<32x128xf32>
    %c4 = arith.constant 4 : index
    %c0_19 = arith.constant 0 : index
    %c0_20 = arith.constant 0 : index
    %26 = vector.load %arg4[%c4, %c0_19, %c0_20] : memref<8x32x128xf32, #tpu.memory_space<vmem>>, vector<1x32x128xf32>
    %27 = vector.shape_cast %26 : vector<1x32x128xf32> to vector<32x128xf32>
    %28 = vector.shape_cast %25 : vector<32x128xf32> to vector<1x32x128xf32>
    tpu.vector_store %arg4[%c4, %c0_19, %c0_20], %28 {strides = array<i32>} : memref<8x32x128xf32, #tpu.memory_space<vmem>>, vector<1x32x128xf32>,
    %29 = vector.extract_strided_slice %2 {offsets = [80, 0], sizes = [16, 128], strides = [1, 1]} : vector<128x128xf32> to vector<16x128xf32>
    %cst_21 = arith.constant dense<0.000000e+00> : vector<32x128xf32>
    %30 = tpu.matmul %3, %29, %cst_21 {dimension_numbers = #tpu.dot_dimension_numbers<[1], [0], [0], [1], [0, 0, 1, 1], [], []>} : vector<32x16xf32>, vector<16x128xf32>, vector<32x128xf32> -> vector<32x128xf32>
    %c5 = arith.constant 5 : index
    %c0_22 = arith.constant 0 : index
    %c0_23 = arith.constant 0 : index
    %31 = vector.load %arg4[%c5, %c0_22, %c0_23] : memref<8x32x128xf32, #tpu.memory_space<vmem>>, vector<1x32x128xf32>
    %32 = vector.shape_cast %31 : vector<1x32x128xf32> to vector<32x128xf32>
    %33 = vector.shape_cast %30 : vector<32x128xf32> to vector<1x32x128xf32>
    tpu.vector_store %arg4[%c5, %c0_22, %c0_23], %33 {strides = array<i32>} : memref<8x32x128xf32, #tpu.memory_space<vmem>>, vector<1x32x128xf32>,
    %34 = vector.extract_strided_slice %2 {offsets = [96, 0], sizes = [16, 128], strides = [1, 1]} : vector<128x128xf32> to vector<16x128xf32>
    %cst_24 = arith.constant dense<0.000000e+00> : vector<32x128xf32>
    %35 = tpu.matmul %3, %34, %cst_24 {dimension_numbers = #tpu.dot_dimension_numbers<[1], [0], [0], [1], [0, 0, 1, 1], [], []>} : vector<32x16xf32>, vector<16x128xf32>, vector<32x128xf32> -> vector<32x128xf32>
    %c6 = arith.constant 6 : index
    %c0_25 = arith.constant 0 : index
    %c0_26 = arith.constant 0 : index
    %36 = vector.load %arg4[%c6, %c0_25, %c0_26] : memref<8x32x128xf32, #tpu.memory_space<vmem>>, vector<1x32x128xf32>
    %37 = vector.shape_cast %36 : vector<1x32x128xf32> to vector<32x128xf32>
    %38 = vector.shape_cast %35 : vector<32x128xf32> to vector<1x32x128xf32>
    tpu.vector_store %arg4[%c6, %c0_25, %c0_26], %38 {strides = array<i32>} : memref<8x32x128xf32, #tpu.memory_space<vmem>>, vector<1x32x128xf32>,
    %39 = vector.extract_strided_slice %2 {offsets = [112, 0], sizes = [16, 128], strides = [1, 1]} : vector<128x128xf32> to vector<16x128xf32>
    %cst_27 = arith.constant dense<0.000000e+00> : vector<32x128xf32>
    %40 = tpu.matmul %3, %39, %cst_27 {dimension_numbers = #tpu.dot_dimension_numbers<[1], [0], [0], [1], [0, 0, 1, 1], [], []>} : vector<32x16xf32>, vector<16x128xf32>, vector<32x128xf32> -> vector<32x128xf32>
    %c7 = arith.constant 7 : index
    %c0_28 = arith.constant 0 : index
    %c0_29 = arith.constant 0 : index
    %41 = vector.load %arg4[%c7, %c0_28, %c0_29] : memref<8x32x128xf32, #tpu.memory_space<vmem>>, vector<1x32x128xf32>
    %42 = vector.shape_cast %41 : vector<1x32x128xf32> to vector<32x128xf32>
    %43 = vector.shape_cast %40 : vector<32x128xf32> to vector<1x32x128xf32>
    tpu.vector_store %arg4[%c7, %c0_28, %c0_29], %43 {strides = array<i32>} : memref<8x32x128xf32, #tpu.memory_space<vmem>>, vector<1x32x128xf32>,
    return
  }
  func.func @transform_0(%arg0: i32) -> (i32, i32) {
    %c0_i32 = arith.constant 0 : i32
    %c0_i32_0 = arith.constant 0 : i32
    %c0_i32_1 = arith.constant 0 : i32
    return %c0_i32, %c0_i32_0 : i32, i32
  }
  func.func @transform_1(%arg0: i32) -> (i32, i32) {
    %c0_i32 = arith.constant 0 : i32
    %c0_i32_0 = arith.constant 0 : i32
    %c0_i32_1 = arith.constant 0 : i32
    return %c0_i32, %c0_i32_0 : i32, i32
  }
  func.func @transform_2(%arg0: i32) -> (i32, i32) {
    %c0_i32 = arith.constant 0 : i32
    %c0_i32_0 = arith.constant 0 : i32
    %c0_i32_1 = arith.constant 0 : i32
    return %c0_i32, %c0_i32_0 : i32, i32
  }
  func.func @transform_3(%arg0: i32) -> (i32, i32, i32) {
    %c0_i32 = arith.constant 0 : i32
    %c0_i32_0 = arith.constant 0 : i32
    %c0_i32_1 = arith.constant 0 : i32
    %c0_i32_2 = arith.constant 0 : i32
    return %c0_i32, %c0_i32_0, %c0_i32_1 : i32, i32, i32
  }
}

</mosaic_0001>

<llo_original>
// kernel: tpu_custom_call.1
$region0: #{tpu_custom_call.1}
  #allocation0 [shape = 'u32[]', space=smem, size = 0x4, offset = 0x4, fixed_abs, tag = 'smem constant byte address 0x4 - core index']
  #allocation1 [shape = 'u32[144,128]{1,0:T(1,128)}', space=vmem, size = 0x12000, scoped, tag = 'internal scratch']
  %s0 = inlined_call_operand.vmem [shape: f32[128,16], index: 0, kind: input, shape index: {}]
  %s1 = inlined_call_operand.vmem [shape: f32[32,16], index: 1, kind: input, shape index: {}]
  %s2 = inlined_call_operand.vmem [shape: f32[16,128], index: 2, kind: input, shape index: {}]
  %s3 = inlined_call_operand.hbm [shape: f32[8,32,128], index: 3, kind: output, shape index: {}]
  %s4 = sld [smem:[#allocation0]]
  $region22: #{tpu_custom_call.1} parent=0
    _
  %s6 = ssub.s32 1, %s4
  %s7 = scalar_select 0, %s6, %s4
  $region1: #{tpu_custom_call.1} parent=0
    #allocation2 [shape = 'u8[131072]{0}', space=vmem, size = 0x20000, scoped, tag = 'output window, operand 0, single buffered']
    #allocation3 [shape = 's32[1]{0}', space=sflag, size = 0x4, scoped, tag = 'scoped memory for tpu_custom_call.1']
    %8 = vsyncpa [#allocation3], 0
    // Predicated region
    $region2: #{tpu_custom_call.1} parent=1 // pred_check
      _
    $region3: #{tpu_custom_call.1} parent=1 // pred_check_branch
      %10 = sbr.rel (0) target = $region5
    $region4: #{tpu_custom_call.1} parent=1 // pred_region
      _
    $region5: #{tpu_custom_call.1} parent=1 // pred_fallthru
      _
    // Predicated region
    $region6: #{tpu_custom_call.1} parent=1 // pred_check
      _
    $region7: #{tpu_custom_call.1} parent=1 // pred_check_branch
      %12 = sbr.rel (0) target = $region9
    $region8: #{tpu_custom_call.1} parent=1 // pred_region
      _
    $region9: #{tpu_custom_call.1} parent=1 // pred_fallthru
      _
    // Predicated region
    $region10: #{tpu_custom_call.1} parent=1 // pred_check
      _
    $region11: #{tpu_custom_call.1} parent=1 // pred_check_branch
      %14 = sbr.rel (0) target = $region13
    $region12: #{tpu_custom_call.1} parent=1 // pred_region
      _
    $region13: #{tpu_custom_call.1} parent=1 // pred_fallthru
      _
    %v15 = vld [vmem:[%s0] sm:$0xff]
    %v16 = vld [vmem:[%s0 + $0x8] sm:$0xff]
    %v17 = vld [vmem:[%s0 + $0x10] sm:$0xff]
    %v18 = vld [vmem:[%s0 + $0x18] sm:$0xff]
    %v19 = vld [vmem:[%s0 + $0x20] sm:$0xff]
    %v20 = vld [vmem:[%s0 + $0x28] sm:$0xff]
    %v21 = vld [vmem:[%s0 + $0x30] sm:$0xff]
    %v22 = vld [vmem:[%s0 + $0x38] sm:$0xff]
    %v23 = vld [vmem:[%s0 + $0x40] sm:$0xff]
    %v24 = vld [vmem:[%s0 + $0x48] sm:$0xff]
    %v25 = vld [vmem:[%s0 + $0x50] sm:$0xff]
    %v26 = vld [vmem:[%s0 + $0x58] sm:$0xff]
    %v27 = vld [vmem:[%s0 + $0x60] sm:$0xff]
    %v28 = vld [vmem:[%s0 + $0x68] sm:$0xff]
    %v29 = vld [vmem:[%s0 + $0x70] sm:$0xff]
    %v30 = vld [vmem:[%s0 + $0x78] sm:$0xff]
    %v31 = vld [vmem:[%s2] sm:$0xff]
    %v32 = vld [vmem:[%s2 + $0x8] sm:$0xff]
    %vm33 = vcmask 130048
    %v35 = vsel %vm33, %v15, 0
    %v38 = vsel %vm33, %v16, 0
    %v41 = vsel %vm33, %v17, 0
    %v44 = vsel %vm33, %v18, 0
    %v47 = vsel %vm33, %v19, 0
    %v50 = vsel %vm33, %v20, 0
    %v53 = vsel %vm33, %v21, 0
    %v56 = vsel %vm33, %v22, 0
    %v59 = vsel %vm33, %v23, 0
    %v62 = vsel %vm33, %v24, 0
    %v65 = vsel %vm33, %v25, 0
    %v68 = vsel %vm33, %v26, 0
    %v71 = vsel %vm33, %v27, 0
    %v74 = vsel %vm33, %v28, 0
    %v77 = vsel %vm33, %v29, 0
    %v80 = vsel %vm33, %v30, 0
    %82 = vmatprep.subr.mxu0 0.0
    %83 = vmatpush1.msra.mxu0 %v31
    %84 = vmatprep.subr.mxu0 0.0
    %85 = vmatpush1.msra.mxu0 %v32
    %86 = vmatprep.subr.mxu0 0.0
    %87 = vmatpush1.msra.mxu0 0.0
    %88 = vmatprep.subr.mxu0 0.0
    %89 = vmatpush1.msra.mxu0 0.0
    %90 = vmatprep.subr.mxu0 0.0
    %91 = vmatpush1.msra.mxu0 0.0
    %92 = vmatprep.subr.mxu0 0.0
    %93 = vmatpush1.msra.mxu0 0.0
    %94 = vmatprep.subr.mxu0 0.0
    %95 = vmatpush1.msra.mxu0 0.0
    %96 = vmatprep.subr.mxu0 0.0
    %97 = vmatpush1.msra.mxu0 0.0
    %98 = vmatprep.subr.mxu0 0.0
    %99 = vmatpush1.msra.mxu0 0.0
    %100 = vmatprep.subr.mxu0 0.0
    %101 = vmatpush1.msra.mxu0 0.0
    %102 = vmatprep.subr.mxu0 0.0
    %103 = vmatpush1.msra.mxu0 0.0
    %104 = vmatprep.subr.mxu0 0.0
    %105 = vmatpush1.msra.mxu0 0.0
    %106 = vmatprep.subr.mxu0 0.0
    %107 = vmatpush1.msra.mxu0 0.0
    %108 = vmatprep.subr.mxu0 0.0
    %109 = vmatpush1.msra.mxu0 0.0
    %110 = vmatprep.subr.mxu0 0.0
    %111 = vmatpush1.msra.mxu0 0.0
    %112 = vmatprep.subr.mxu0 0.0
    %113 = vmatpush1.msra.mxu0 0.0
    %114 = vmatprep.subr.mxu0 0.0
    %115 = vmatpush1.msra.mxu0 0.0
    %116 = vmatprep.subr.mxu0 0.0
    %117 = vmatpush1.msra.mxu0 0.0
    %118 = vmatprep.subr.mxu0 0.0
    %119 = vmatpush1.msra.mxu0 0.0
    %120 = vmatprep.subr.mxu0 0.0
    %121 = vmatpush1.msra.mxu0 0.0
    %122 = vmatprep.subr.mxu0 0.0
    %123 = vmatpush1.msra.mxu0 0.0
    %124 = vmatprep.subr.mxu0 0.0
    %125 = vmatpush1.msra.mxu0 0.0
    %126 = vmatprep.subr.mxu0 0.0
    %127 = vmatpush1.msra.mxu0 0.0
    %128 = vmatprep.subr.mxu0 0.0
    %129 = vmatpush1.msra.mxu0 0.0
    %130 = vmatprep.subr.mxu0 0.0
    %131 = vmatpush1.msra.mxu0 0.0
    %132 = vmatprep.subr.mxu0 0.0
    %133 = vmatpush1.msra.mxu0 0.0
    %134 = vmatprep.subr.mxu0 0.0
    %135 = vmatpush1.msra.mxu0 0.0
    %136 = vmatprep.subr.mxu0 0.0
    %137 = vmatpush1.msra.mxu0 0.0
    %138 = vmatprep.subr.mxu0 0.0
    %139 = vmatpush1.msra.mxu0 0.0
    %140 = vmatprep.subr.mxu0 0.0
    %141 = vmatpush1.msra.mxu0 0.0
    %142 = vmatprep.subr.mxu0 0.0
    %143 = vmatpush1.msra.mxu0 0.0
    %144 = vmatprep.subr.mxu0 0.0
    %145 = vmatpush1.msra.mxu0 0.0
    %146 = vmatprep.mubr.f32.mxu0 0.0
    %147 = vmatmul.mubr.f32.gmra.mrb[0].mxu0 %v35
    %v148 = vpop.f32.mrb[0].mxu0
    %v149 = vadd.f32 0.0, %v148
    %v150 = vpop.f32.mrb[0].mxu0
    %151 = vmatprep.mubr.f32.mxu0 0.0
    %152 = vmatmul.mubr.f32.gmra.mrb[0].mxu0 %v38
    %v153 = vpop.f32.mrb[0].mxu0
    %v154 = vadd.f32 0.0, %v153
    %v155 = vpop.f32.mrb[0].mxu0
    %156 = vmatprep.mubr.f32.mxu0 0.0
    %157 = vmatmul.mubr.f32.gmra.mrb[0].mxu0 %v41
    %v158 = vpop.f32.mrb[0].mxu0
    %v159 = vadd.f32 0.0, %v158
    %v160 = vpop.f32.mrb[0].mxu0
    %161 = vmatprep.mubr.f32.mxu0 0.0
    %162 = vmatmul.mubr.f32.gmra.mrb[0].mxu0 %v44
    %v163 = vpop.f32.mrb[0].mxu0
    %v164 = vadd.f32 0.0, %v163
    %v165 = vpop.f32.mrb[0].mxu0
    %166 = vmatprep.mubr.f32.mxu0 0.0
    %167 = vmatmul.mubr.f32.gmra.mrb[0].mxu0 %v47
    %v168 = vpop.f32.mrb[0].mxu0
    %v169 = vadd.f32 0.0, %v168
    %v170 = vpop.f32.mrb[0].mxu0
    %171 = vmatprep.mubr.f32.mxu0 0.0
    %172 = vmatmul.mubr.f32.gmra.mrb[0].mxu0 %v50
    %v173 = vpop.f32.mrb[0].mxu0
    %v174 = vadd.f32 0.0, %v173
    %v175 = vpop.f32.mrb[0].mxu0
    %176 = vmatprep.mubr.f32.mxu0 0.0
    %177 = vmatmul.mubr.f32.gmra.mrb[0].mxu0 %v53
    %v178 = vpop.f32.mrb[0].mxu0
    %v179 = vadd.f32 0.0, %v178
    %v180 = vpop.f32.mrb[0].mxu0
    %181 = vmatprep.mubr.f32.mxu0 0.0
    %182 = vmatmul.mubr.f32.gmra.mrb[0].mxu0 %v56
    %v183 = vpop.f32.mrb[0].mxu0
    %v184 = vadd.f32 0.0, %v183
    %v185 = vpop.f32.mrb[0].mxu0
    %186 = vmatprep.mubr.f32.mxu0 0.0
    %187 = vmatmul.mubr.f32.gmra.mrb[0].mxu0 %v59
    %v188 = vpop.f32.mrb[0].mxu0
    %v189 = vadd.f32 0.0, %v188
    %v190 = vpop.f32.mrb[0].mxu0
    %191 = vmatprep.mubr.f32.mxu0 0.0
    %192 = vmatmul.mubr.f32.gmra.mrb[0].mxu0 %v62
    %v193 = vpop.f32.mrb[0].mxu0
    %v194 = vadd.f32 0.0, %v193
    %v195 = vpop.f32.mrb[0].mxu0
    %196 = vmatprep.mubr.f32.mxu0 0.0
    %197 = vmatmul.mubr.f32.gmra.mrb[0].mxu0 %v65
    %v198 = vpop.f32.mrb[0].mxu0
    %v199 = vadd.f32 0.0, %v198
    %v200 = vpop.f32.mrb[0].mxu0
    %201 = vmatprep.mubr.f32.mxu0 0.0
    %202 = vmatmul.mubr.f32.gmra.mrb[0].mxu0 %v68
    %v203 = vpop.f32.mrb[0].mxu0
    %v204 = vadd.f32 0.0, %v203
    %v205 = vpop.f32.mrb[0].mxu0
    %206 = vmatprep.mubr.f32.mxu0 0.0
    %207 = vmatmul.mubr.f32.gmra.mrb[0].mxu0 %v71
    %v208 = vpop.f32.mrb[0].mxu0
    %v209 = vadd.f32 0.0, %v208
    %v210 = vpop.f32.mrb[0].mxu0
    %211 = vmatprep.mubr.f32.mxu0 0.0
    %212 = vmatmul.mubr.f32.gmra.mrb[0].mxu0 %v74
    %v213 = vpop.f32.mrb[0].mxu0
    %v214 = vadd.f32 0.0, %v213
    %v215 = vpop.f32.mrb[0].mxu0
    %216 = vmatprep.mubr.f32.mxu0 0.0
    %217 = vmatmul.mubr.f32.gmra.mrb[0].mxu0 %v77
    %v218 = vpop.f32.mrb[0].mxu0
    %v219 = vadd.f32 0.0, %v218
    %v220 = vpop.f32.mrb[0].mxu0
    %221 = vmatprep.mubr.f32.mxu0 0.0
    %222 = vmatmul.mubr.f32.gmra.mrb[0].mxu0 %v80
    %v223 = vpop.f32.mrb[0].mxu0
    %v224 = vadd.f32 0.0, %v223
    %v225 = vpop.f32.mrb[0].mxu0
    %226 = vdwg.mxu0
    %v227 = vld [vmem:[%s1] sm:$0xff]
    %v228 = vld [vmem:[%s1 + $0x8] sm:$0xff]
    %v229 = vld [vmem:[%s1 + $0x10] sm:$0xff]
    %v230 = vld [vmem:[%s1 + $0x18] sm:$0xff]
    %v232 = vsel %vm33, %v227, 0
    %v235 = vsel %vm33, %v228, 0
    %v238 = vsel %vm33, %v229, 0
    %v241 = vsel %vm33, %v230, 0
    %243 = vmatprep.subr.mxu0 0.0
    %244 = vmatpush1.msra.mxu0 %v149
    %245 = vmatprep.subr.mxu0 0.0
    %246 = vmatpush1.msra.mxu0 %v154
    %247 = vmatprep.subr.mxu0 0.0
    %248 = vmatpush1.msra.mxu0 0.0
    %249 = vmatprep.subr.mxu0 0.0
    %250 = vmatpush1.msra.mxu0 0.0
    %251 = vmatprep.subr.mxu0 0.0
    %252 = vmatpush1.msra.mxu0 0.0
    %253 = vmatprep.subr.mxu0 0.0
    %254 = vmatpush1.msra.mxu0 0.0
    %255 = vmatprep.subr.mxu0 0.0
    %256 = vmatpush1.msra.mxu0 0.0
    %257 = vmatprep.subr.mxu0 0.0
    %258 = vmatpush1.msra.mxu0 0.0
    %259 = vmatprep.subr.mxu0 0.0
    %260 = vmatpush1.msra.mxu0 0.0
    %261 = vmatprep.subr.mxu0 0.0
    %262 = vmatpush1.msra.mxu0 0.0
    %263 = vmatprep.subr.mxu0 0.0
    %264 = vmatpush1.msra.mxu0 0.0
    %265 = vmatprep.subr.mxu0 0.0
    %266 = vmatpush1.msra.mxu0 0.0
    %267 = vmatprep.subr.mxu0 0.0
    %268 = vmatpush1.msra.mxu0 0.0
    %269 = vmatprep.subr.mxu0 0.0
    %270 = vmatpush1.msra.mxu0 0.0
    %271 = vmatprep.subr.mxu0 0.0
    %272 = vmatpush1.msra.mxu0 0.0
    %273 = vmatprep.subr.mxu0 0.0
    %274 = vmatpush1.msra.mxu0 0.0
    %275 = vmatprep.subr.mxu0 0.0
    %276 = vmatpush1.msra.mxu0 0.0
    %277 = vmatprep.subr.mxu0 0.0
    %278 = vmatpush1.msra.mxu0 0.0
    %279 = vmatprep.subr.mxu0 0.0
    %280 = vmatpush1.msra.mxu0 0.0
    %281 = vmatprep.subr.mxu0 0.0
    %282 = vmatpush1.msra.mxu0 0.0
    %283 = vmatprep.subr.mxu0 0.0
    %284 = vmatpush1.msra.mxu0 0.0
    %285 = vmatprep.subr.mxu0 0.0
    %286 = vmatpush1.msra.mxu0 0.0
    %287 = vmatprep.subr.mxu0 0.0
    %288 = vmatpush1.msra.mxu0 0.0
    %289 = vmatprep.subr.mxu0 0.0
    %290 = vmatpush1.msra.mxu0 0.0
    %291 = vmatprep.subr.mxu0 0.0
    %292 = vmatpush1.msra.mxu0 0.0
    %293 = vmatprep.subr.mxu0 0.0
    %294 = vmatpush1.msra.mxu0 0.0
    %295 = vmatprep.subr.mxu0 0.0
    %296 = vmatpush1.msra.mxu0 0.0
    %297 = vmatprep.subr.mxu0 0.0
    %298 = vmatpush1.msra.mxu0 0.0
    %299 = vmatprep.subr.mxu0 0.0
    %300 = vmatpush1.msra.mxu0 0.0
    %301 = vmatprep.subr.mxu0 0.0
    %302 = vmatpush1.msra.mxu0 0.0
    %303 = vmatprep.subr.mxu0 0.0
    %304 = vmatpush1.msra.mxu0 0.0
    %305 = vmatprep.subr.mxu0 0.0
    %306 = vmatpush1.msra.mxu0 0.0
    %307 = vmatprep.mubr.f32.mxu0 0.0
    %308 = vmatmul.mubr.f32.gmra.mrb[0].mxu0 %v232
    %v309 = vpop.f32.mrb[0].mxu0
    %v310 = vadd.f32 0.0, %v309
    %v311 = vpop.f32.mrb[0].mxu0
    %312 = vmatprep.mubr.f32.mxu0 0.0
    %313 = vmatmul.mubr.f32.gmra.mrb[0].mxu0 %v235
    %v314 = vpop.f32.mrb[0].mxu0
    %v315 = vadd.f32 0.0, %v314
    %v316 = vpop.f32.mrb[0].mxu0
    %317 = vmatprep.mubr.f32.mxu0 0.0
    %318 = vmatmul.mubr.f32.gmra.mrb[0].mxu0 %v238
    %v319 = vpop.f32.mrb[0].mxu0
    %v320 = vadd.f32 0.0, %v319
    %v321 = vpop.f32.mrb[0].mxu0
    %322 = vmatprep.mubr.f32.mxu0 0.0
    %323 = vmatmul.mubr.f32.gmra.mrb[0].mxu0 %v241
    %v324 = vpop.f32.mrb[0].mxu0
    %v325 = vadd.f32 0.0, %v324
    %v326 = vpop.f32.mrb[0].mxu0
    %327 = vdwg.mxu0
    %328 = vst [vmem:[#allocation2] sm:$0xff] %v310
    %329 = vst [vmem:[#allocation2 + $0x8] sm:$0xff] %v315
    %330 = vst [vmem:[#allocation2 + $0x10] sm:$0xff] %v320
    %331 = vst [vmem:[#allocation2 + $0x18] sm:$0xff] %v325
    %332 = vmatprep.subr.mxu0 0.0
    %333 = vmatpush1.msra.mxu0 %v159
    %334 = vmatprep.subr.mxu0 0.0
    %335 = vmatpush1.msra.mxu0 %v164
    %336 = vmatprep.subr.mxu0 0.0
    %337 = vmatpush1.msra.mxu0 0.0
    %338 = vmatprep.subr.mxu0 0.0
    %339 = vmatpush1.msra.mxu0 0.0
    %340 = vmatprep.subr.mxu0 0.0
    %341 = vmatpush1.msra.mxu0 0.0
    %342 = vmatprep.subr.mxu0 0.0
    %343 = vmatpush1.msra.mxu0 0.0
    %344 = vmatprep.subr.mxu0 0.0
    %345 = vmatpush1.msra.mxu0 0.0
    %346 = vmatprep.subr.mxu0 0.0
    %347 = vmatpush1.msra.mxu0 0.0
    %348 = vmatprep.subr.mxu0 0.0
    %349 = vmatpush1.msra.mxu0 0.0
    %350 = vmatprep.subr.mxu0 0.0
    %351 = vmatpush1.msra.mxu0 0.0
    %352 = vmatprep.subr.mxu0 0.0
    %353 = vmatpush1.msra.mxu0 0.0
    %354 = vmatprep.subr.mxu0 0.0
    %355 = vmatpush1.msra.mxu0 0.0
    %356 = vmatprep.subr.mxu0 0.0
    %357 = vmatpush1.msra.mxu0 0.0
    %358 = vmatprep.subr.mxu0 0.0
    %359 = vmatpush1.msra.mxu0 0.0
    %360 = vmatprep.subr.mxu0 0.0
    %361 = vmatpush1.msra.mxu0 0.0
    %362 = vmatprep.subr.mxu0 0.0
    %363 = vmatpush1.msra.mxu0 0.0
    %364 = vmatprep.subr.mxu0 0.0
    %365 = vmatpush1.msra.mxu0 0.0
    %366 = vmatprep.subr.mxu0 0.0
    %367 = vmatpush1.msra.mxu0 0.0
    %368 = vmatprep.subr.mxu0 0.0
    %369 = vmatpush1.msra.mxu0 0.0
    %370 = vmatprep.subr.mxu0 0.0
    %371 = vmatpush1.msra.mxu0 0.0
    %372 = vmatprep.subr.mxu0 0.0
    %373 = vmatpush1.msra.mxu0 0.0
    %374 = vmatprep.subr.mxu0 0.0
    %375 = vmatpush1.msra.mxu0 0.0
    %376 = vmatprep.subr.mxu0 0.0
    %377 = vmatpush1.msra.mxu0 0.0
    %378 = vmatprep.subr.mxu0 0.0
    %379 = vmatpush1.msra.mxu0 0.0
    %380 = vmatprep.subr.mxu0 0.0
    %381 = vmatpush1.msra.mxu0 0.0
    %382 = vmatprep.subr.mxu0 0.0
    %383 = vmatpush1.msra.mxu0 0.0
    %384 = vmatprep.subr.mxu0 0.0
    %385 = vmatpush1.msra.mxu0 0.0
    %386 = vmatprep.subr.mxu0 0.0
    %387 = vmatpush1.msra.mxu0 0.0
    %388 = vmatprep.subr.mxu0 0.0
    %389 = vmatpush1.msra.mxu0 0.0
    %390 = vmatprep.subr.mxu0 0.0
    %391 = vmatpush1.msra.mxu0 0.0
    %392 = vmatprep.subr.mxu0 0.0
    %393 = vmatpush1.msra.mxu0 0.0
    %394 = vmatprep.subr.mxu0 0.0
    %395 = vmatpush1.msra.mxu0 0.0
    %396 = vmatprep.mubr.f32.mxu0 0.0
    %397 = vmatmul.mubr.f32.gmra.mrb[0].mxu0 %v232
    %v398 = vpop.f32.mrb[0].mxu0
    %v399 = vadd.f32 0.0, %v398
    %v400 = vpop.f32.mrb[0].mxu0
    %401 = vmatprep.mubr.f32.mxu0 0.0
    %402 = vmatmul.mubr.f32.gmra.mrb[0].mxu0 %v235
    %v403 = vpop.f32.mrb[0].mxu0
    %v404 = vadd.f32 0.0, %v403
    %v405 = vpop.f32.mrb[0].mxu0
    %406 = vmatprep.mubr.f32.mxu0 0.0
    %407 = vmatmul.mubr.f32.gmra.mrb[0].mxu0 %v238
    %v408 = vpop.f32.mrb[0].mxu0
    %v409 = vadd.f32 0.0, %v408
    %v410 = vpop.f32.mrb[0].mxu0
    %411 = vmatprep.mubr.f32.mxu0 0.0
    %412 = vmatmul.mubr.f32.gmra.mrb[0].mxu0 %v241
    %v413 = vpop.f32.mrb[0].mxu0
    %v414 = vadd.f32 0.0, %v413
    %v415 = vpop.f32.mrb[0].mxu0
    %416 = vdwg.mxu0
    %s417 = scalar_lea.vmem [#allocation2], 32
    %418 = vst [vmem:[%s417] sm:$0xff] %v399
    %419 = vst [vmem:[%s417 + $0x8] sm:$0xff] %v404
    %420 = vst [vmem:[%s417 + $0x10] sm:$0xff] %v409
    %421 = vst [vmem:[%s417 + $0x18] sm:$0xff] %v414
    %422 = vmatprep.subr.mxu0 0.0
    %423 = vmatpush1.msra.mxu0 %v169
    %424 = vmatprep.subr.mxu0 0.0
    %425 = vmatpush1.msra.mxu0 %v174
    %426 = vmatprep.subr.mxu0 0.0
    %427 = vmatpush1.msra.mxu0 0.0
    %428 = vmatprep.subr.mxu0 0.0
    %429 = vmatpush1.msra.mxu0 0.0
    %430 = vmatprep.subr.mxu0 0.0
    %431 = vmatpush1.msra.mxu0 0.0
    %432 = vmatprep.subr.mxu0 0.0
    %433 = vmatpush1.msra.mxu0 0.0
    %434 = vmatprep.subr.mxu0 0.0
    %435 = vmatpush1.msra.mxu0 0.0
    %436 = vmatprep.subr.mxu0 0.0
    %437 = vmatpush1.msra.mxu0 0.0
    %438 = vmatprep.subr.mxu0 0.0
    %439 = vmatpush1.msra.mxu0 0.0
    %440 = vmatprep.subr.mxu0 0.0
    %441 = vmatpush1.msra.mxu0 0.0
    %442 = vmatprep.subr.mxu0 0.0
    %443 = vmatpush1.msra.mxu0 0.0
    %444 = vmatprep.subr.mxu0 0.0
    %445 = vmatpush1.msra.mxu0 0.0
    %446 = vmatprep.subr.mxu0 0.0
    %447 = vmatpush1.msra.mxu0 0.0
    %448 = vmatprep.subr.mxu0 0.0
    %449 = vmatpush1.msra.mxu0 0.0
    %450 = vmatprep.subr.mxu0 0.0
    %451 = vmatpush1.msra.mxu0 0.0
    %452 = vmatprep.subr.mxu0 0.0
    %453 = vmatpush1.msra.mxu0 0.0
    %454 = vmatprep.subr.mxu0 0.0
    %455 = vmatpush1.msra.mxu0 0.0
    %456 = vmatprep.subr.mxu0 0.0
    %457 = vmatpush1.msra.mxu0 0.0
    %458 = vmatprep.subr.mxu0 0.0
    %459 = vmatpush1.msra.mxu0 0.0
    %460 = vmatprep.subr.mxu0 0.0
    %461 = vmatpush1.msra.mxu0 0.0
    %462 = vmatprep.subr.mxu0 0.0
    %463 = vmatpush1.msra.mxu0 0.0
    %464 = vmatprep.subr.mxu0 0.0
    %465 = vmatpush1.msra.mxu0 0.0
    %466 = vmatprep.subr.mxu0 0.0
    %467 = vmatpush1.msra.mxu0 0.0
    %468 = vmatprep.subr.mxu0 0.0
    %469 = vmatpush1.msra.mxu0 0.0
    %470 = vmatprep.subr.mxu0 0.0
    %471 = vmatpush1.msra.mxu0 0.0
    %472 = vmatprep.subr.mxu0 0.0
    %473 = vmatpush1.msra.mxu0 0.0
    %474 = vmatprep.subr.mxu0 0.0
    %475 = vmatpush1.msra.mxu0 0.0
    %476 = vmatprep.subr.mxu0 0.0
    %477 = vmatpush1.msra.mxu0 0.0
    %478 = vmatprep.subr.mxu0 0.0
    %479 = vmatpush1.msra.mxu0 0.0
    %480 = vmatprep.subr.mxu0 0.0
    %481 = vmatpush1.msra.mxu0 0.0
    %482 = vmatprep.subr.mxu0 0.0
    %483 = vmatpush1.msra.mxu0 0.0
    %484 = vmatprep.subr.mxu0 0.0
    %485 = vmatpush1.msra.mxu0 0.0
    %486 = vmatprep.mubr.f32.mxu0 0.0
    %487 = vmatmul.mubr.f32.gmra.mrb[0].mxu0 %v232
    %v488 = vpop.f32.mrb[0].mxu0
    %v489 = vadd.f32 0.0, %v488
    %v490 = vpop.f32.mrb[0].mxu0
    %491 = vmatprep.mubr.f32.mxu0 0.0
    %492 = vmatmul.mubr.f32.gmra.mrb[0].mxu0 %v235
    %v493 = vpop.f32.mrb[0].mxu0
    %v494 = vadd.f32 0.0, %v493
    %v495 = vpop.f32.mrb[0].mxu0
    %496 = vmatprep.mubr.f32.mxu0 0.0
    %497 = vmatmul.mubr.f32.gmra.mrb[0].mxu0 %v238
    %v498 = vpop.f32.mrb[0].mxu0
    %v499 = vadd.f32 0.0, %v498
    %v500 = vpop.f32.mrb[0].mxu0
    %501 = vmatprep.mubr.f32.mxu0 0.0
    %502 = vmatmul.mubr.f32.gmra.mrb[0].mxu0 %v241
    %v503 = vpop.f32.mrb[0].mxu0
    %v504 = vadd.f32 0.0, %v503
    %v505 = vpop.f32.mrb[0].mxu0
    %506 = vdwg.mxu0
    %s507 = scalar_lea.vmem [#allocation2], 64
    %508 = vst [vmem:[%s507] sm:$0xff] %v489
    %509 = vst [vmem:[%s507 + $0x8] sm:$0xff] %v494
    %510 = vst [vmem:[%s507 + $0x10] sm:$0xff] %v499
    %511 = vst [vmem:[%s507 + $0x18] sm:$0xff] %v504
    %512 = vmatprep.subr.mxu0 0.0
    %513 = vmatpush1.msra.mxu0 %v179
    %514 = vmatprep.subr.mxu0 0.0
    %515 = vmatpush1.msra.mxu0 %v184
    %516 = vmatprep.subr.mxu0 0.0
    %517 = vmatpush1.msra.mxu0 0.0
    %518 = vmatprep.subr.mxu0 0.0
    %519 = vmatpush1.msra.mxu0 0.0
    %520 = vmatprep.subr.mxu0 0.0
    %521 = vmatpush1.msra.mxu0 0.0
    %522 = vmatprep.subr.mxu0 0.0
    %523 = vmatpush1.msra.mxu0 0.0
    %524 = vmatprep.subr.mxu0 0.0
    %525 = vmatpush1.msra.mxu0 0.0
    %526 = vmatprep.subr.mxu0 0.0
    %527 = vmatpush1.msra.mxu0 0.0
    %528 = vmatprep.subr.mxu0 0.0
    %529 = vmatpush1.msra.mxu0 0.0
    %530 = vmatprep.subr.mxu0 0.0
    %531 = vmatpush1.msra.mxu0 0.0
    %532 = vmatprep.subr.mxu0 0.0
    %533 = vmatpush1.msra.mxu0 0.0
    %534 = vmatprep.subr.mxu0 0.0
    %535 = vmatpush1.msra.mxu0 0.0
    %536 = vmatprep.subr.mxu0 0.0
    %537 = vmatpush1.msra.mxu0 0.0
    %538 = vmatprep.subr.mxu0 0.0
    %539 = vmatpush1.msra.mxu0 0.0
    %540 = vmatprep.subr.mxu0 0.0
    %541 = vmatpush1.msra.mxu0 0.0
    %542 = vmatprep.subr.mxu0 0.0
    %543 = vmatpush1.msra.mxu0 0.0
    %544 = vmatprep.subr.mxu0 0.0
    %545 = vmatpush1.msra.mxu0 0.0
    %546 = vmatprep.subr.mxu0 0.0
    %547 = vmatpush1.msra.mxu0 0.0
    %548 = vmatprep.subr.mxu0 0.0
    %549 = vmatpush1.msra.mxu0 0.0
    %550 = vmatprep.subr.mxu0 0.0
    %551 = vmatpush1.msra.mxu0 0.0
    %552 = vmatprep.subr.mxu0 0.0
    %553 = vmatpush1.msra.mxu0 0.0
    %554 = vmatprep.subr.mxu0 0.0
    %555 = vmatpush1.msra.mxu0 0.0
    %556 = vmatprep.subr.mxu0 0.0
    %557 = vmatpush1.msra.mxu0 0.0
    %558 = vmatprep.subr.mxu0 0.0
    %559 = vmatpush1.msra.mxu0 0.0
    %560 = vmatprep.subr.mxu0 0.0
    %561 = vmatpush1.msra.mxu0 0.0
    %562 = vmatprep.subr.mxu0 0.0
    %563 = vmatpush1.msra.mxu0 0.0
    %564 = vmatprep.subr.mxu0 0.0
    %565 = vmatpush1.msra.mxu0 0.0
    %566 = vmatprep.subr.mxu0 0.0
    %567 = vmatpush1.msra.mxu0 0.0
    %568 = vmatprep.subr.mxu0 0.0
    %569 = vmatpush1.msra.mxu0 0.0
    %570 = vmatprep.subr.mxu0 0.0
    %571 = vmatpush1.msra.mxu0 0.0
    %572 = vmatprep.subr.mxu0 0.0
    %573 = vmatpush1.msra.mxu0 0.0
    %574 = vmatprep.subr.mxu0 0.0
    %575 = vmatpush1.msra.mxu0 0.0
    %576 = vmatprep.mubr.f32.mxu0 0.0
    %577 = vmatmul.mubr.f32.gmra.mrb[0].mxu0 %v232
    %v578 = vpop.f32.mrb[0].mxu0
    %v579 = vadd.f32 0.0, %v578
    %v580 = vpop.f32.mrb[0].mxu0
    %581 = vmatprep.mubr.f32.mxu0 0.0
    %582 = vmatmul.mubr.f32.gmra.mrb[0].mxu0 %v235
    %v583 = vpop.f32.mrb[0].mxu0
    %v584 = vadd.f32 0.0, %v583
    %v585 = vpop.f32.mrb[0].mxu0
    %586 = vmatprep.mubr.f32.mxu0 0.0
    %587 = vmatmul.mubr.f32.gmra.mrb[0].mxu0 %v238
    %v588 = vpop.f32.mrb[0].mxu0
    %v589 = vadd.f32 0.0, %v588
    %v590 = vpop.f32.mrb[0].mxu0
    %591 = vmatprep.mubr.f32.mxu0 0.0
    %592 = vmatmul.mubr.f32.gmra.mrb[0].mxu0 %v241
    %v593 = vpop.f32.mrb[0].mxu0
    %v594 = vadd.f32 0.0, %v593
    %v595 = vpop.f32.mrb[0].mxu0
    %596 = vdwg.mxu0
    %s597 = scalar_lea.vmem [#allocation2], 96
    %598 = vst [vmem:[%s597] sm:$0xff] %v579
    %599 = vst [vmem:[%s597 + $0x8] sm:$0xff] %v584
    %600 = vst [vmem:[%s597 + $0x10] sm:$0xff] %v589
    %601 = vst [vmem:[%s597 + $0x18] sm:$0xff] %v594
    %602 = vmatprep.subr.mxu0 0.0
    %603 = vmatpush1.msra.mxu0 %v189
    %604 = vmatprep.subr.mxu0 0.0
    %605 = vmatpush1.msra.mxu0 %v194
    %606 = vmatprep.subr.mxu0 0.0
    %607 = vmatpush1.msra.mxu0 0.0
    %608 = vmatprep.subr.mxu0 0.0
    %609 = vmatpush1.msra.mxu0 0.0
    %610 = vmatprep.subr.mxu0 0.0
    %611 = vmatpush1.msra.mxu0 0.0
    %612 = vmatprep.subr.mxu0 0.0
    %613 = vmatpush1.msra.mxu0 0.0
    %614 = vmatprep.subr.mxu0 0.0
    %615 = vmatpush1.msra.mxu0 0.0
    %616 = vmatprep.subr.mxu0 0.0
    %617 = vmatpush1.msra.mxu0 0.0
    %618 = vmatprep.subr.mxu0 0.0
    %619 = vmatpush1.msra.mxu0 0.0
    %620 = vmatprep.subr.mxu0 0.0
    %621 = vmatpush1.msra.mxu0 0.0
    %622 = vmatprep.subr.mxu0 0.0
    %623 = vmatpush1.msra.mxu0 0.0
    %624 = vmatprep.subr.mxu0 0.0
    %625 = vmatpush1.msra.mxu0 0.0
    %626 = vmatprep.subr.mxu0 0.0
    %627 = vmatpush1.msra.mxu0 0.0
    %628 = vmatprep.subr.mxu0 0.0
    %629 = vmatpush1.msra.mxu0 0.0
    %630 = vmatprep.subr.mxu0 0.0
    %631 = vmatpush1.msra.mxu0 0.0
    %632 = vmatprep.subr.mxu0 0.0
    %633 = vmatpush1.msra.mxu0 0.0
    %634 = vmatprep.subr.mxu0 0.0
    %635 = vmatpush1.msra.mxu0 0.0
    %636 = vmatprep.subr.mxu0 0.0
    %637 = vmatpush1.msra.mxu0 0.0
    %638 = vmatprep.subr.mxu0 0.0
    %639 = vmatpush1.msra.mxu0 0.0
    %640 = vmatprep.subr.mxu0 0.0
    %641 = vmatpush1.msra.mxu0 0.0
    %642 = vmatprep.subr.mxu0 0.0
    %643 = vmatpush1.msra.mxu0 0.0
    %644 = vmatprep.subr.mxu0 0.0
    %645 = vmatpush1.msra.mxu0 0.0
    %646 = vmatprep.subr.mxu0 0.0
    %647 = vmatpush1.msra.mxu0 0.0
    %648 = vmatprep.subr.mxu0 0.0
    %649 = vmatpush1.msra.mxu0 0.0
    %650 = vmatprep.subr.mxu0 0.0
    %651 = vmatpush1.msra.mxu0 0.0
    %652 = vmatprep.subr.mxu0 0.0
    %653 = vmatpush1.msra.mxu0 0.0
    %654 = vmatprep.subr.mxu0 0.0
    %655 = vmatpush1.msra.mxu0 0.0
    %656 = vmatprep.subr.mxu0 0.0
    %657 = vmatpush1.msra.mxu0 0.0
    %658 = vmatprep.subr.mxu0 0.0
    %659 = vmatpush1.msra.mxu0 0.0
    %660 = vmatprep.subr.mxu0 0.0
    %661 = vmatpush1.msra.mxu0 0.0
    %662 = vmatprep.subr.mxu0 0.0
    %663 = vmatpush1.msra.mxu0 0.0
    %664 = vmatprep.subr.mxu0 0.0
    %665 = vmatpush1.msra.mxu0 0.0
    %666 = vmatprep.mubr.f32.mxu0 0.0
    %667 = vmatmul.mubr.f32.gmra.mrb[0].mxu0 %v232
    %v668 = vpop.f32.mrb[0].mxu0
    %v669 = vadd.f32 0.0, %v668
    %v670 = vpop.f32.mrb[0].mxu0
    %671 = vmatprep.mubr.f32.mxu0 0.0
    %672 = vmatmul.mubr.f32.gmra.mrb[0].mxu0 %v235
    %v673 = vpop.f32.mrb[0].mxu0
    %v674 = vadd.f32 0.0, %v673
    %v675 = vpop.f32.mrb[0].mxu0
    %676 = vmatprep.mubr.f32.mxu0 0.0
    %677 = vmatmul.mubr.f32.gmra.mrb[0].mxu0 %v238
    %v678 = vpop.f32.mrb[0].mxu0
    %v679 = vadd.f32 0.0, %v678
    %v680 = vpop.f32.mrb[0].mxu0
    %681 = vmatprep.mubr.f32.mxu0 0.0
    %682 = vmatmul.mubr.f32.gmra.mrb[0].mxu0 %v241
    %v683 = vpop.f32.mrb[0].mxu0
    %v684 = vadd.f32 0.0, %v683
    %v685 = vpop.f32.mrb[0].mxu0
    %686 = vdwg.mxu0
    %s687 = scalar_lea.vmem [#allocation2], 128
    %688 = vst [vmem:[%s687] sm:$0xff] %v669
    %689 = vst [vmem:[%s687 + $0x8] sm:$0xff] %v674
    %690 = vst [vmem:[%s687 + $0x10] sm:$0xff] %v679
    %691 = vst [vmem:[%s687 + $0x18] sm:$0xff] %v684
    %692 = vmatprep.subr.mxu0 0.0
    %693 = vmatpush1.msra.mxu0 %v199
    %694 = vmatprep.subr.mxu0 0.0
    %695 = vmatpush1.msra.mxu0 %v204
    %696 = vmatprep.subr.mxu0 0.0
    %697 = vmatpush1.msra.mxu0 0.0
    %698 = vmatprep.subr.mxu0 0.0
    %699 = vmatpush1.msra.mxu0 0.0
    %700 = vmatprep.subr.mxu0 0.0
    %701 = vmatpush1.msra.mxu0 0.0
    %702 = vmatprep.subr.mxu0 0.0
    %703 = vmatpush1.msra.mxu0 0.0
    %704 = vmatprep.subr.mxu0 0.0
    %705 = vmatpush1.msra.mxu0 0.0
    %706 = vmatprep.subr.mxu0 0.0
    %707 = vmatpush1.msra.mxu0 0.0
    %708 = vmatprep.subr.mxu0 0.0
    %709 = vmatpush1.msra.mxu0 0.0
    %710 = vmatprep.subr.mxu0 0.0
    %711 = vmatpush1.msra.mxu0 0.0
    %712 = vmatprep.subr.mxu0 0.0
    %713 = vmatpush1.msra.mxu0 0.0
    %714 = vmatprep.subr.mxu0 0.0
    %715 = vmatpush1.msra.mxu0 0.0
    %716 = vmatprep.subr.mxu0 0.0
    %717 = vmatpush1.msra.mxu0 0.0
    %718 = vmatprep.subr.mxu0 0.0
    %719 = vmatpush1.msra.mxu0 0.0
    %720 = vmatprep.subr.mxu0 0.0
    %721 = vmatpush1.msra.mxu0 0.0
    %722 = vmatprep.subr.mxu0 0.0
    %723 = vmatpush1.msra.mxu0 0.0
    %724 = vmatprep.subr.mxu0 0.0
    %725 = vmatpush1.msra.mxu0 0.0
    %726 = vmatprep.subr.mxu0 0.0
    %727 = vmatpush1.msra.mxu0 0.0
    %728 = vmatprep.subr.mxu0 0.0
    %729 = vmatpush1.msra.mxu0 0.0
    %730 = vmatprep.subr.mxu0 0.0
    %731 = vmatpush1.msra.mxu0 0.0
    %732 = vmatprep.subr.mxu0 0.0
    %733 = vmatpush1.msra.mxu0 0.0
    %734 = vmatprep.subr.mxu0 0.0
    %735 = vmatpush1.msra.mxu0 0.0
    %736 = vmatprep.subr.mxu0 0.0
    %737 = vmatpush1.msra.mxu0 0.0
    %738 = vmatprep.subr.mxu0 0.0
    %739 = vmatpush1.msra.mxu0 0.0
    %740 = vmatprep.subr.mxu0 0.0
    %741 = vmatpush1.msra.mxu0 0.0
    %742 = vmatprep.subr.mxu0 0.0
    %743 = vmatpush1.msra.mxu0 0.0
    %744 = vmatprep.subr.mxu0 0.0
    %745 = vmatpush1.msra.mxu0 0.0
    %746 = vmatprep.subr.mxu0 0.0
    %747 = vmatpush1.msra.mxu0 0.0
    %748 = vmatprep.subr.mxu0 0.0
    %749 = vmatpush1.msra.mxu0 0.0
    %750 = vmatprep.subr.mxu0 0.0
    %751 = vmatpush1.msra.mxu0 0.0
    %752 = vmatprep.subr.mxu0 0.0
    %753 = vmatpush1.msra.mxu0 0.0
    %754 = vmatprep.subr.mxu0 0.0
    %755 = vmatpush1.msra.mxu0 0.0
    %756 = vmatprep.mubr.f32.mxu0 0.0
    %757 = vmatmul.mubr.f32.gmra.mrb[0].mxu0 %v232
    %v758 = vpop.f32.mrb[0].mxu0
    %v759 = vadd.f32 0.0, %v758
    %v760 = vpop.f32.mrb[0].mxu0
    %761 = vmatprep.mubr.f32.mxu0 0.0
    %762 = vmatmul.mubr.f32.gmra.mrb[0].mxu0 %v235
    %v763 = vpop.f32.mrb[0].mxu0
    %v764 = vadd.f32 0.0, %v763
    %v765 = vpop.f32.mrb[0].mxu0
    %766 = vmatprep.mubr.f32.mxu0 0.0
    %767 = vmatmul.mubr.f32.gmra.mrb[0].mxu0 %v238
    %v768 = vpop.f32.mrb[0].mxu0
    %v769 = vadd.f32 0.0, %v768
    %v770 = vpop.f32.mrb[0].mxu0
    %771 = vmatprep.mubr.f32.mxu0 0.0
    %772 = vmatmul.mubr.f32.gmra.mrb[0].mxu0 %v241
    %v773 = vpop.f32.mrb[0].mxu0
    %v774 = vadd.f32 0.0, %v773
    %v775 = vpop.f32.mrb[0].mxu0
    %776 = vdwg.mxu0
    %s777 = scalar_lea.vmem [#allocation2], 160
    %778 = vst [vmem:[%s777] sm:$0xff] %v759
    %779 = vst [vmem:[%s777 + $0x8] sm:$0xff] %v764
    %780 = vst [vmem:[%s777 + $0x10] sm:$0xff] %v769
    %781 = vst [vmem:[%s777 + $0x18] sm:$0xff] %v774
    %782 = vmatprep.subr.mxu0 0.0
    %783 = vmatpush1.msra.mxu0 %v209
    %784 = vmatprep.subr.mxu0 0.0
    %785 = vmatpush1.msra.mxu0 %v214
    %786 = vmatprep.subr.mxu0 0.0
    %787 = vmatpush1.msra.mxu0 0.0
    %788 = vmatprep.subr.mxu0 0.0
    %789 = vmatpush1.msra.mxu0 0.0
    %790 = vmatprep.subr.mxu0 0.0
    %791 = vmatpush1.msra.mxu0 0.0
    %792 = vmatprep.subr.mxu0 0.0
    %793 = vmatpush1.msra.mxu0 0.0
    %794 = vmatprep.subr.mxu0 0.0
    %795 = vmatpush1.msra.mxu0 0.0
    %796 = vmatprep.subr.mxu0 0.0
    %797 = vmatpush1.msra.mxu0 0.0
    %798 = vmatprep.subr.mxu0 0.0
    %799 = vmatpush1.msra.mxu0 0.0
    %800 = vmatprep.subr.mxu0 0.0
    %801 = vmatpush1.msra.mxu0 0.0
    %802 = vmatprep.subr.mxu0 0.0
    %803 = vmatpush1.msra.mxu0 0.0
    %804 = vmatprep.subr.mxu0 0.0
    %805 = vmatpush1.msra.mxu0 0.0
    %806 = vmatprep.subr.mxu0 0.0
    %807 = vmatpush1.msra.mxu0 0.0
    %808 = vmatprep.subr.mxu0 0.0
    %809 = vmatpush1.msra.mxu0 0.0
    %810 = vmatprep.subr.mxu0 0.0
    %811 = vmatpush1.msra.mxu0 0.0
    %812 = vmatprep.subr.mxu0 0.0
    %813 = vmatpush1.msra.mxu0 0.0
    %814 = vmatprep.subr.mxu0 0.0
    %815 = vmatpush1.msra.mxu0 0.0
    %816 = vmatprep.subr.mxu0 0.0
    %817 = vmatpush1.msra.mxu0 0.0
    %818 = vmatprep.subr.mxu0 0.0
    %819 = vmatpush1.msra.mxu0 0.0
    %820 = vmatprep.subr.mxu0 0.0
    %821 = vmatpush1.msra.mxu0 0.0
    %822 = vmatprep.subr.mxu0 0.0
    %823 = vmatpush1.msra.mxu0 0.0
    %824 = vmatprep.subr.mxu0 0.0
    %825 = vmatpush1.msra.mxu0 0.0
    %826 = vmatprep.subr.mxu0 0.0
    %827 = vmatpush1.msra.mxu0 0.0
    %828 = vmatprep.subr.mxu0 0.0
    %829 = vmatpush1.msra.mxu0 0.0
    %830 = vmatprep.subr.mxu0 0.0
    %831 = vmatpush1.msra.mxu0 0.0
    %832 = vmatprep.subr.mxu0 0.0
    %833 = vmatpush1.msra.mxu0 0.0
    %834 = vmatprep.subr.mxu0 0.0
    %835 = vmatpush1.msra.mxu0 0.0
    %836 = vmatprep.subr.mxu0 0.0
    %837 = vmatpush1.msra.mxu0 0.0
    %838 = vmatprep.subr.mxu0 0.0
    %839 = vmatpush1.msra.mxu0 0.0
    %840 = vmatprep.subr.mxu0 0.0
    %841 = vmatpush1.msra.mxu0 0.0
    %842 = vmatprep.subr.mxu0 0.0
    %843 = vmatpush1.msra.mxu0 0.0
    %844 = vmatprep.subr.mxu0 0.0
    %845 = vmatpush1.msra.mxu0 0.0
    %846 = vmatprep.mubr.f32.mxu0 0.0
    %847 = vmatmul.mubr.f32.gmra.mrb[0].mxu0 %v232
    %v848 = vpop.f32.mrb[0].mxu0
    %v849 = vadd.f32 0.0, %v848
    %v850 = vpop.f32.mrb[0].mxu0
    %851 = vmatprep.mubr.f32.mxu0 0.0
    %852 = vmatmul.mubr.f32.gmra.mrb[0].mxu0 %v235
    %v853 = vpop.f32.mrb[0].mxu0
    %v854 = vadd.f32 0.0, %v853
    %v855 = vpop.f32.mrb[0].mxu0
    %856 = vmatprep.mubr.f32.mxu0 0.0
    %857 = vmatmul.mubr.f32.gmra.mrb[0].mxu0 %v238
    %v858 = vpop.f32.mrb[0].mxu0
    %v859 = vadd.f32 0.0, %v858
    %v860 = vpop.f32.mrb[0].mxu0
    %861 = vmatprep.mubr.f32.mxu0 0.0
    %862 = vmatmul.mubr.f32.gmra.mrb[0].mxu0 %v241
    %v863 = vpop.f32.mrb[0].mxu0
    %v864 = vadd.f32 0.0, %v863
    %v865 = vpop.f32.mrb[0].mxu0
    %866 = vdwg.mxu0
    %s867 = scalar_lea.vmem [#allocation2], 192
    %868 = vst [vmem:[%s867] sm:$0xff] %v849
    %869 = vst [vmem:[%s867 + $0x8] sm:$0xff] %v854
    %870 = vst [vmem:[%s867 + $0x10] sm:$0xff] %v859
    %871 = vst [vmem:[%s867 + $0x18] sm:$0xff] %v864
    %872 = vmatprep.subr.mxu0 0.0
    %873 = vmatpush1.msra.mxu0 %v219
    %874 = vmatprep.subr.mxu0 0.0
    %875 = vmatpush1.msra.mxu0 %v224
    %876 = vmatprep.subr.mxu0 0.0
    %877 = vmatpush1.msra.mxu0 0.0
    %878 = vmatprep.subr.mxu0 0.0
    %879 = vmatpush1.msra.mxu0 0.0
    %880 = vmatprep.subr.mxu0 0.0
    %881 = vmatpush1.msra.mxu0 0.0
    %882 = vmatprep.subr.mxu0 0.0
    %883 = vmatpush1.msra.mxu0 0.0
    %884 = vmatprep.subr.mxu0 0.0
    %885 = vmatpush1.msra.mxu0 0.0
    %886 = vmatprep.subr.mxu0 0.0
    %887 = vmatpush1.msra.mxu0 0.0
    %888 = vmatprep.subr.mxu0 0.0
    %889 = vmatpush1.msra.mxu0 0.0
    %890 = vmatprep.subr.mxu0 0.0
    %891 = vmatpush1.msra.mxu0 0.0
    %892 = vmatprep.subr.mxu0 0.0
    %893 = vmatpush1.msra.mxu0 0.0
    %894 = vmatprep.subr.mxu0 0.0
    %895 = vmatpush1.msra.mxu0 0.0
    %896 = vmatprep.subr.mxu0 0.0
    %897 = vmatpush1.msra.mxu0 0.0
    %898 = vmatprep.subr.mxu0 0.0
    %899 = vmatpush1.msra.mxu0 0.0
    %900 = vmatprep.subr.mxu0 0.0
    %901 = vmatpush1.msra.mxu0 0.0
    %902 = vmatprep.subr.mxu0 0.0
    %903 = vmatpush1.msra.mxu0 0.0
    %904 = vmatprep.subr.mxu0 0.0
    %905 = vmatpush1.msra.mxu0 0.0
    %906 = vmatprep.subr.mxu0 0.0
    %907 = vmatpush1.msra.mxu0 0.0
    %908 = vmatprep.subr.mxu0 0.0
    %909 = vmatpush1.msra.mxu0 0.0
    %910 = vmatprep.subr.mxu0 0.0
    %911 = vmatpush1.msra.mxu0 0.0
    %912 = vmatprep.subr.mxu0 0.0
    %913 = vmatpush1.msra.mxu0 0.0
    %914 = vmatprep.subr.mxu0 0.0
    %915 = vmatpush1.msra.mxu0 0.0
    %916 = vmatprep.subr.mxu0 0.0
    %917 = vmatpush1.msra.mxu0 0.0
    %918 = vmatprep.subr.mxu0 0.0
    %919 = vmatpush1.msra.mxu0 0.0
    %920 = vmatprep.subr.mxu0 0.0
    %921 = vmatpush1.msra.mxu0 0.0
    %922 = vmatprep.subr.mxu0 0.0
    %923 = vmatpush1.msra.mxu0 0.0
    %924 = vmatprep.subr.mxu0 0.0
    %925 = vmatpush1.msra.mxu0 0.0
    %926 = vmatprep.subr.mxu0 0.0
    %927 = vmatpush1.msra.mxu0 0.0
    %928 = vmatprep.subr.mxu0 0.0
    %929 = vmatpush1.msra.mxu0 0.0
    %930 = vmatprep.subr.mxu0 0.0
    %931 = vmatpush1.msra.mxu0 0.0
    %932 = vmatprep.subr.mxu0 0.0
    %933 = vmatpush1.msra.mxu0 0.0
    %934 = vmatprep.subr.mxu0 0.0
    %935 = vmatpush1.msra.mxu0 0.0
    %936 = vmatprep.mubr.f32.mxu0 0.0
    %937 = vmatmul.mubr.f32.gmra.mrb[0].mxu0 %v232
    %v938 = vpop.f32.mrb[0].mxu0
    %v939 = vadd.f32 0.0, %v938
    %v940 = vpop.f32.mrb[0].mxu0
    %941 = vmatprep.mubr.f32.mxu0 0.0
    %942 = vmatmul.mubr.f32.gmra.mrb[0].mxu0 %v235
    %v943 = vpop.f32.mrb[0].mxu0
    %v944 = vadd.f32 0.0, %v943
    %v945 = vpop.f32.mrb[0].mxu0
    %946 = vmatprep.mubr.f32.mxu0 0.0
    %947 = vmatmul.mubr.f32.gmra.mrb[0].mxu0 %v238
    %v948 = vpop.f32.mrb[0].mxu0
    %v949 = vadd.f32 0.0, %v948
    %v950 = vpop.f32.mrb[0].mxu0
    %951 = vmatprep.mubr.f32.mxu0 0.0
    %952 = vmatmul.mubr.f32.gmra.mrb[0].mxu0 %v241
    %v953 = vpop.f32.mrb[0].mxu0
    %v954 = vadd.f32 0.0, %v953
    %v955 = vpop.f32.mrb[0].mxu0
    %956 = vdwg.mxu0
    %s957 = scalar_lea.vmem [#allocation2], 224
    %958 = vst [vmem:[%s957] sm:$0xff] %v939
    %959 = vst [vmem:[%s957 + $0x8] sm:$0xff] %v944
    %960 = vst [vmem:[%s957 + $0x10] sm:$0xff] %v949
    %961 = vst [vmem:[%s957 + $0x18] sm:$0xff] %v954
    // Predicated region
    $region14: #{tpu_custom_call.1} parent=1 // pred_check
      _
    $region15: #{tpu_custom_call.1} parent=1 // pred_check_branch
      %963 = sbr.rel (0) target = $region17
    $region16: #{tpu_custom_call.1} parent=1 // pred_region
      %s965 = ssub.s32 4096, 4096
      %966 = vsyncadd [#allocation3], %s965
      %s967 = sshll.u32 [#allocation2], 4
      %s968 = int_to_ptr.vmem [resolvable:$true] %s967
      %973 = dma.vmem_to_hbm [thread:$0]  %s968, 4096, %s3, [#allocation3], 128, 128, 8
    $region17: #{tpu_custom_call.1} parent=1 // pred_fallthru
      _
    // Predicated region
    $region18: #{tpu_custom_call.1} parent=1 // pred_check
      _
    $region19: #{tpu_custom_call.1} parent=1 // pred_check_branch
      %975 = sbr.rel (0) target = $region21
    $region20: #{tpu_custom_call.1} parent=1 // pred_region
      %976 = dma.done [#allocation3], 4096
    $region21: #{tpu_custom_call.1} parent=1 // pred_fallthru
      _
    %977 = vsyncpa [#allocation3], 1

</llo_original>
